<compile_context>
chip_gen: v6e
topology: v6e:2x2x1
jax: 0.10.0
libtpu: 0.0.40
codegen_flags: <defaults>
</compile_context>

<pallas_src>
import functools

import jax
import jax.numpy as jnp
import numpy as np
from jax.experimental import pallas as pl
from jax.experimental.pallas import tpu as pltpu


def _round_up(x, m):
    return ((x + m - 1) // m) * m


def _cdiv(a, b):
    return -(-a // b)


def _embedder_kernel(x_ref, o_ref, *, freq_bands, include_input, input_dim):
    # x_ref: (input_dim, TILE_N) f32, N on the lane axis (lane-dense).
    # o_ref: (TILE_N, out_dim), natural layout (samples on sublanes).
    x = x_ref[...]
    tile_n = x.shape[1]
    nf = len(freq_bands)

    parts = []
    if include_input:
        parts.append(x)

    if nf > 0:
        # Pack all frequency products so sin/cos each run once on a tall
        # (nf*input_dim, TILE_N) operand instead of 2*nf skinny calls.
        xf = jnp.concatenate([x * jnp.float32(f) for f in freq_bands], axis=0)
        s = jnp.sin(xf)           # (nf*input_dim, TILE_N)
        c = jnp.cos(xf)           # (nf*input_dim, TILE_N)
        for k in range(nf):
            lo, hi = k * input_dim, (k + 1) * input_dim
            parts.append(s[lo:hi])    # sin(x * f_k)  -- matches PyTorch ordering
            parts.append(c[lo:hi])    # cos(x * f_k)

    out_rows = sum(int(p.shape[0]) for p in parts)    # == out_dim
    pad = (-out_rows) % 8                             # sublane-align the transpose
    if pad:
        parts.append(jnp.zeros((pad, tile_n), jnp.float32))

    feat = jnp.concatenate(parts, axis=0)             # (out_dim+pad, TILE_N)
    # Fold the layout change into the kernel epilogue: one XLU transpose and a
    # single store of the natural-layout block (no wrapper-side HBM transpose).
    feat_t = jnp.transpose(feat, (1, 0))              # (TILE_N, out_dim+pad)
    o_ref[...] = feat_t[:, : o_ref.shape[1]].astype(o_ref.dtype)


class Embedder:
    """JAX/Pallas port of models.networks.Embedder (no learned parameters)."""

    # TODO(synk): only the default periodic_fns=(sin, cos) are supported.

    def __init__(self, input_dim, max_freq_log2, N_freqs,
                 log_sampling=True, include_input=True):
        self.input_dim = input_dim
        self.include_input = include_input
        self.N_freqs = N_freqs
        self.out_dim = 0
        if include_input:
            self.out_dim += input_dim
        self.out_dim += input_dim * N_freqs * 2       # (sin, cos)
        if log_sampling:
            freqs = 2.0 ** np.linspace(0.0, max_freq_log2, N_freqs)
        else:
            freqs = np.linspace(2.0 ** 0.0, 2.0 ** max_freq_log2, N_freqs)
        self.freq_bands = tuple(float(f) for f in freqs)

    def _pick_tile(self, n, tile_cap):
        # Largest useful lane tile, >=2 (preferably even) grid steps when there
        # is enough work (v7x megacore balance), minimal padding.
        cap = max(128, _round_up(int(tile_cap), 128))
        num_tiles = max(1, _cdiv(n, cap))
        if n > 128:
            num_tiles = max(num_tiles, 2)
        if num_tiles > 1 and num_tiles % 2 == 1:
            num_tiles += 1
        tile = _round_up(_cdiv(n, num_tiles), 128)
        grid_n = _cdiv(n, tile)
        return tile, grid_n

    def __call__(self, x, tile_n=16384, out_dtype=None):
        assert x.shape[-1] == self.input_dim
        orig_shape = x.shape
        out_dtype = jnp.dtype(x.dtype) if out_dtype is None else jnp.dtype(out_dtype)

        # Flatten leading dims; cast + transpose happen in one small input pass
        # so N lands on the lane (last) axis for the kernel.
        x2 = x.reshape(-1, self.input_dim).astype(jnp.float32)
        n_rows = int(x2.shape[0])
        n = max(n_rows, 1)
        xt = x2.T                                      # (input_dim, N)

        tile, grid_n = self._pick_tile(n, tile_n)
        n_pad = grid_n * tile
        if n_pad != n_rows:
            xt = jnp.pad(xt, ((0, 0), (0, n_pad - n_rows)))

        kernel = functools.partial(
            _embedder_kernel,
            freq_bands=self.freq_bands,
            include_input=self.include_input,
            input_dim=self.input_dim,
        )

        nf = len(self.freq_bands)
        cost = pl.CostEstimate(
            flops=2 * n * self.input_dim * nf,
            transcendentals=2 * n * self.input_dim * nf,
            bytes_accessed=n * (self.input_dim * 4 + self.out_dim * out_dtype.itemsize),
        )

        out = pl.pallas_call(
            kernel,
            out_shape=jax.ShapeDtypeStruct((n_pad, self.out_dim), out_dtype),
            grid_spec=pl.GridSpec(
                grid=(grid_n,),
                in_specs=[pl.BlockSpec((self.input_dim, tile), lambda i: (0, i))],
                out_specs=pl.BlockSpec((tile, self.out_dim), lambda i: (i, 0)),
            ),
            compiler_params=pltpu.CompilerParams(
                dimension_semantics=("parallel",),
                vmem_limit_bytes=64 * 1024 * 1024,
            ),
            cost_estimate=cost,
        )(xt)

        if n_pad != n_rows:
            out = out[:n_rows]
        return out.reshape(*orig_shape[:-1], self.out_dim)


def _reference(x, embedder):
    x = x.astype(jnp.float32)
    parts = []
    if embedder.include_input:
        parts.append(x)
    for f in embedder.freq_bands:
        parts.append(jnp.sin(x * f))
        parts.append(jnp.cos(x * f))
    return jnp.concatenate(parts, axis=-1)


if __name__ == "__main__":
    # Small NeRF-like config: 3-D positions, 4 frequency bands.
    input_dim, max_freq_log2, N_freqs = 3, 3, 4
    embedder = Embedder(input_dim, max_freq_log2, N_freqs,
                        log_sampling=True, include_input=True)

    # Case 1: small batch (single grid step, padding 32 -> 128 columns).
    x = jax.random.normal(jax.random.PRNGKey(0), (2, 16, input_dim), dtype=jnp.float32)
    out = jax.block_until_ready(embedder(x))
    assert out.shape == (2, 16, embedder.out_dim), out.shape
    ref = _reference(x, embedder)
    assert jnp.allclose(out, ref, atol=1e-5, rtol=1e-5), "mismatch vs reference (case 1)"

    # Case 2: exercises padding + a balanced 2-step ("parallel") grid.
    x2 = jax.random.normal(jax.random.PRNGKey(1), (4, 300, input_dim), dtype=jnp.float32)
    out2 = jax.block_until_ready(embedder(x2))
    assert out2.shape == (4, 300, embedder.out_dim), out2.shape
    ref2 = _reference(x2, embedder)
    assert jnp.allclose(out2, ref2, atol=1e-5, rtol=1e-5), "mismatch vs reference (case 2)"

    # Case 3: bf16 output path (f32 math inside the kernel, bf16 final store).
    out3 = jax.block_until_ready(embedder(x2, out_dtype=jnp.bfloat16))
    assert out3.shape == (4, 300, embedder.out_dim), out3.shape
    assert out3.dtype == jnp.bfloat16
    assert jnp.allclose(out3.astype(jnp.float32), ref2, atol=0.1, rtol=0.05), \
        "mismatch vs reference (case 3, bf16)"

    print("KERNEL_OK")
</pallas_src>

<mosaic_0001>
module attributes {stable_mosaic.version = 11 : i64} {
  func.func @_embedder_kernel(%arg0: i32, %arg1: memref<3x128xf32, #tpu.memory_space<vmem>>, %arg2: memref<128x27xf32, #tpu.memory_space<vmem>>) attributes {dimension_semantics = [#tpu.dimension_semantics<parallel>], iteration_bounds = array<i64: 1>, scalar_prefetch = 0 : i64, scratch_operands = 0 : i64, tpu.core_type = #tpu.core_type<tc>, window_params = [{transform_indices = @transform_0, window_bounds = array<i64: 3, 128>}, {transform_indices = @transform_1, window_bounds = array<i64: 128, 27>}]} {
    %c0 = arith.constant 0 : index
    %c0_0 = arith.constant 0 : index
    %0 = vector.load %arg1[%c0, %c0_0] : memref<3x128xf32, #tpu.memory_space<vmem>>, vector<3x128xf32>
    %cst = arith.constant 1.000000e+00 : f32
    %1 = vector.broadcast %cst : f32 to vector<3x128xf32>
    %2 = arith.mulf %0, %1 : vector<3x128xf32>
    %cst_1 = arith.constant 2.000000e+00 : f32
    %3 = vector.broadcast %cst_1 : f32 to vector<3x128xf32>
    %4 = arith.mulf %0, %3 : vector<3x128xf32>
    %cst_2 = arith.constant 4.000000e+00 : f32
    %5 = vector.broadcast %cst_2 : f32 to vector<3x128xf32>
    %6 = arith.mulf %0, %5 : vector<3x128xf32>
    %cst_3 = arith.constant 8.000000e+00 : f32
    %7 = vector.broadcast %cst_3 : f32 to vector<3x128xf32>
    %8 = arith.mulf %0, %7 : vector<3x128xf32>
    %9 = tpu.concatenate %2, %4, %6, %8 in 0 : vector<3x128xf32>, vector<3x128xf32>, vector<3x128xf32>, vector<3x128xf32> -> vector<12x128xf32>
    %10 = math.sin %9 : vector<12x128xf32>
    %11 = math.cos %9 : vector<12x128xf32>
    %12 = vector.extract_strided_slice %10 {offsets = [0, 0], sizes = [3, 128], strides = [1, 1]} : vector<12x128xf32> to vector<3x128xf32>
    %13 = vector.extract_strided_slice %11 {offsets = [0, 0], sizes = [3, 128], strides = [1, 1]} : vector<12x128xf32> to vector<3x128xf32>
    %14 = vector.extract_strided_slice %10 {offsets = [3, 0], sizes = [3, 128], strides = [1, 1]} : vector<12x128xf32> to vector<3x128xf32>
    %15 = vector.extract_strided_slice %11 {offsets = [3, 0], sizes = [3, 128], strides = [1, 1]} : vector<12x128xf32> to vector<3x128xf32>
    %16 = vector.extract_strided_slice %10 {offsets = [6, 0], sizes = [3, 128], strides = [1, 1]} : vector<12x128xf32> to vector<3x128xf32>
    %17 = vector.extract_strided_slice %11 {offsets = [6, 0], sizes = [3, 128], strides = [1, 1]} : vector<12x128xf32> to vector<3x128xf32>
    %18 = vector.extract_strided_slice %10 {offsets = [9, 0], sizes = [3, 128], strides = [1, 1]} : vector<12x128xf32> to vector<3x128xf32>
    %19 = vector.extract_strided_slice %11 {offsets = [9, 0], sizes = [3, 128], strides = [1, 1]} : vector<12x128xf32> to vector<3x128xf32>
    %cst_4 = arith.constant 0.000000e+00 : f32
    %20 = vector.broadcast %cst_4 : f32 to vector<5x128xf32>
    %21 = tpu.concatenate %0, %12, %13, %14, %15, %16, %17, %18, %19, %20 in 0 : vector<3x128xf32>, vector<3x128xf32>, vector<3x128xf32>, vector<3x128xf32>, vector<3x128xf32>, vector<3x128xf32>, vector<3x128xf32>, vector<3x128xf32>, vector<3x128xf32>, vector<5x128xf32> -> vector<32x128xf32>
    %22 = tpu.transpose %21, [1, 0] : vector<32x128xf32> -> vector<128x32xf32>
    %23 = vector.extract_strided_slice %22 {offsets = [0, 0], sizes = [128, 27], strides = [1, 1]} : vector<128x32xf32> to vector<128x27xf32>
    %c0_5 = arith.constant 0 : index
    %c0_6 = arith.constant 0 : index
    %24 = vector.load %arg2[%c0_5, %c0_6] : memref<128x27xf32, #tpu.memory_space<vmem>>, vector<128x27xf32>
    tpu.vector_store %arg2[%c0_5, %c0_6], %23 {strides = array<i32>} : memref<128x27xf32, #tpu.memory_space<vmem>>, vector<128x27xf32>,
    return
  }
  func.func @transform_0(%arg0: i32) -> (i32, i32) {
    %c0_i32 = arith.constant 0 : i32
    %c0_i32_0 = arith.constant 0 : i32
    return %c0_i32, %arg0 : i32, i32
  }
  func.func @transform_1(%arg0: i32) -> (i32, i32) {
    %c0_i32 = arith.constant 0 : i32
    %c0_i32_0 = arith.constant 0 : i32
    return %arg0, %c0_i32 : i32, i32
  }
}

</mosaic_0001>

<llo_original>
// kernel: tpu_custom_call.1
$region0: #{tpu_custom_call.1}
  #allocation0 [shape = 'u32[]', space=smem, size = 0x4, offset = 0x4, fixed_abs, tag = 'smem constant byte address 0x4 - core index']
  #allocation1 [shape = 'u32[144,128]{1,0:T(1,128)}', space=vmem, size = 0x12000, scoped, tag = 'internal scratch']
  %s0 = inlined_call_operand.hbm [shape: f32[3,128], index: 0, kind: input, shape index: {}]
  %s1 = inlined_call_operand.vmem [shape: f32[128,27], index: 1, kind: output, shape index: {}]
  %s2 = sld [smem:[#allocation0]]
  $region18: #{tpu_custom_call.1} parent=0
    _
  %s4 = ssub.s32 1, %s2
  %s5 = scalar_select 0, %s4, %s2
  $region1: #{tpu_custom_call.1} parent=0
    #allocation2 [shape = 'u8[2048]{0}', space=vmem, size = 0x800, scoped, tag = 'input window, operand 0, single buffered']
    #allocation3 [shape = 's32[1]{0}', space=sflag, size = 0x4, scoped, tag = 'scoped memory for tpu_custom_call.1']
    %6 = vsyncpa [#allocation3], 0
    // Predicated region
    $region2: #{tpu_custom_call.1} parent=1 // pred_check
      _
    $region3: #{tpu_custom_call.1} parent=1 // pred_check_branch
      %8 = sbr.rel (0) target = $region5
    $region4: #{tpu_custom_call.1} parent=1 // pred_region
      %s10 = ssub.s32 64, 64
      %11 = vsyncadd [#allocation3], %s10
      %s13 = sshll.u32 [#allocation2], 4
      %s14 = int_to_ptr.vmem [resolvable:$true] %s13
      %16 = dma.hbm_to_vmem [thread:$0]  %s0, 64, %s14, [#allocation3]
    $region5: #{tpu_custom_call.1} parent=1 // pred_fallthru
      _
    // Predicated region
    $region6: #{tpu_custom_call.1} parent=1 // pred_check
      _
    $region7: #{tpu_custom_call.1} parent=1 // pred_check_branch
      %18 = sbr.rel (0) target = $region9
    $region8: #{tpu_custom_call.1} parent=1 // pred_region
      %19 = dma.done [#allocation3], 64
    $region9: #{tpu_custom_call.1} parent=1 // pred_fallthru
      _
    %v20 = vld [vmem:[#allocation2] sm:$0x7]
    %v21 = vmul.f32 %v20, 2.0
    %v22 = vmul.f32 %v20, 4.0
    %v23 = vmul.f32 %v20, 8.0
    %v25 = vrot.slane %v21, 5
    %v28 = vrot.slane %v22, 2
    %v31 = vrot.slane %v23, 7
    %vm33 = vcmask 1042432
    %v34 = vsel %vm33, %v20, %v25
    %vm35 = vcmask 1045504
    %v36 = vsel %vm35, %v34, %v28
    %vm37 = vcmask 1040384
    %v38 = vsel %vm37, %v28, %v31
    %v39 = vand.u32 2147483647, %v36
    %vm40 = vcmp.le.f32.partialorder %v39, 0.7853982
    %vm41 = vcmp.lt.s32.totalorder %v36, 0
    %v42 = vand.u32 %v36, 2139095040
    %v43 = vshrl.u32 %v42, 23
    %v44 = vsub.s32 %v43, 127
    %v45 = vand.u32 2147483647, %v36
    %v46 = vand.u32 %v45, 8388607
    %v47 = vor.u32 %v46, 8388608
    %v48 = vsub.s32 0, %v47
    %v49 = vadd.s32 %v44, 1
    %vm50 = vcmp.gt.s32.totalorder %v49, 0
    %v51 = vsel %vm50, %v49, 0
    %v52 = vshrl.u32 %v51, 5
    %v53 = vand.u32 %v51, 31
    %v54 = vsub.s32 32, %v53
    %v55 = vshrl.u32 683565275, %v54
    %v56 = vshll.u32 683565275, %v53
    %v57 = vshrl.u32 2475754826, %v54
    %v58 = vor.u32 %v56, %v57
    %v59 = vshll.u32 2475754826, %v53
    %v60 = vshrl.u32 2131351028, %v54
    %v61 = vor.u32 %v59, %v60
    %v62 = vshll.u32 2131351028, %v53
    %v63 = vshrl.u32 2102212464, %v54
    %v64 = vor.u32 %v62, %v63
    %v65 = vshll.u32 2102212464, %v53
    %v66 = vshrl.u32 920167782, %v54
    %v67 = vor.u32 %v65, %v66
    %v68 = vshll.u32 920167782, %v53
    %v69 = vshrl.u32 1326507024, %v54
    %v70 = vor.u32 %v68, %v69
    %vm71 = vcmp.lt.s32.totalorder %v52, 1
    %vm72 = vcmp.lt.s32.totalorder %v52, 2
    %vm73 = vcmp.lt.s32.totalorder %v52, 3
    %vm74 = vcmp.lt.s32.totalorder %v52, 4
    %v75 = vsel %vm71, %v55, %v58
    %v76 = vsel %vm74, %v64, 2102212464
    %v77 = vsel %vm73, %v61, %v76
    %v78 = vsel %vm72, %v75, %v77
    %v79 = vsel %vm71, %v58, %v61
    %v80 = vsel %vm74, %v67, 920167782
    %v81 = vsel %vm73, %v64, %v80
    %v82 = vsel %vm72, %v79, %v81
    %v83 = vsel %vm71, %v61, %v64
    %v84 = vsel %vm74, %v70, 1326507024
    %v85 = vsel %vm73, %v67, %v84
    %v86 = vsel %vm72, %v83, %v85
    %v87 = vshll.u32 %v47, 8
    %v88 = vmul.u32.u64.compose %v87, %v86
    %v89 = vextract.low.u32 %v88
    %v90 = vextract.high.u32 %v88
    %v91 = vmul.u32.u64.compose %v87, %v82
    %v92 = vextract.low.u32 %v91
    %v93 = vextract.high.u32 %v91
    %v94 = vmul.u32 %v87, %v78
    %v95 = vadd.s32 %v90, %v92
    %vm96 = vc.u32 %v90, %v92
    %v97 = vadd.s32 %v93, 1
    %v98 = vsel %vm96, %v97, %v93
    %v99 = vadd.s32 %v94, %v98
    %v100 = vadd.s32 %v99, 536870912
    %v101 = vshrl.u32 %v100, 30
    %v102 = vshll.u32 %v101, 30
    %v103 = vsub.s32 %v99, %v102
    %vm104 = vcmp.lt.s32.totalorder %v103, 0
    %v105 = vsub.s32 0, %v103
    %v106 = vsel %vm104, %v105, %v103
    %v107 = vclz %v106
    %v108 = vsub.s32 %v107, 2
    %vm109 = vcmp.gt.s32.totalorder 0, %v108
    %v110 = vsel %vm109, 0, %v108
    %v111 = vsub.s32 32, %v110
    %v112 = vshll.u32 %v103, %v110
    %v113 = vshrl.u32 %v95, %v111
    %v114 = vor.u32 %v112, %v113
    %v115 = vsub.s32 4294967266, %v110
    %v116 = vadd.s32 %v115, 127
    %v117 = vshll.u32 %v116, 23
    %v118 = vor.u32 4788187, %v117
    %v119 = vand.u32 2147483647, %v118
    %v121 = vcvt.s32.f32 %v114
    %v122 = vmul.f32 %v121, %v119
    %v123 = vxor.u32 %v122, 2147483648
    %v124 = vsel %vm41, %v123, %v122
    %v125 = vsub.s32 4, %v101
    %v126 = vsel %vm41, %v125, %v101
    %v127 = vsel %vm40, %v36, %v124
    %v128 = vsel %vm40, 0, %v126
    %v129 = vcosq.f32.pop %v127
    %v130 = vsinq.f32.pop %v127
    %vm131 = vweird.f32 %v36
    %v132 = vadd.s32 %v128, 3
    %v133 = vand.u32 %v132, 3
    %vm134 = vcmp.lt.s32.totalorder %v133, 2
    %vm135 = vcmp.eq.s32.totalorder %v133, 0
    %v136 = vxor.u32 %v130, 2147483648
    %v137 = vsel %vm135, %v129, %v136
    %vm138 = vcmp.eq.s32.totalorder %v133, 2
    %v139 = vxor.u32 %v129, 2147483648
    %v140 = vsel %vm138, %v139, %v130
    %v141 = vsel %vm134, %v137, %v140
    %v142 = vsel %vm131, nan, %v141
    %v143 = vand.u32 2147483647, %v38
    %vm144 = vcmp.le.f32.partialorder %v143, 0.7853982
    %vm145 = vcmp.lt.s32.totalorder %v38, 0
    %v146 = vand.u32 %v38, 2139095040
    %v147 = vshrl.u32 %v146, 23
    %v148 = vsub.s32 %v147, 127
    %v149 = vand.u32 2147483647, %v38
    %v150 = vand.u32 %v149, 8388607
    %v151 = vor.u32 %v150, 8388608
    %v152 = vsub.s32 0, %v151
    %v153 = vadd.s32 %v148, 1
    %vm154 = vcmp.gt.s32.totalorder %v153, 0
    %v155 = vsel %vm154, %v153, 0
    %v156 = vshrl.u32 %v155, 5
    %v157 = vand.u32 %v155, 31
    %v158 = vsub.s32 32, %v157
    %v159 = vshrl.u32 683565275, %v158
    %v160 = vshll.u32 683565275, %v157
    %v161 = vshrl.u32 2475754826, %v158
    %v162 = vor.u32 %v160, %v161
    %v163 = vshll.u32 2475754826, %v157
    %v164 = vshrl.u32 2131351028, %v158
    %v165 = vor.u32 %v163, %v164
    %v166 = vshll.u32 2131351028, %v157
    %v167 = vshrl.u32 2102212464, %v158
    %v168 = vor.u32 %v166, %v167
    %v169 = vshll.u32 2102212464, %v157
    %v170 = vshrl.u32 920167782, %v158
    %v171 = vor.u32 %v169, %v170
    %v172 = vshll.u32 920167782, %v157
    %v173 = vshrl.u32 1326507024, %v158
    %v174 = vor.u32 %v172, %v173
    %vm175 = vcmp.lt.s32.totalorder %v156, 1
    %vm176 = vcmp.lt.s32.totalorder %v156, 2
    %vm177 = vcmp.lt.s32.totalorder %v156, 3
    %vm178 = vcmp.lt.s32.totalorder %v156, 4
    %v179 = vsel %vm175, %v159, %v162
    %v180 = vsel %vm178, %v168, 2102212464
    %v181 = vsel %vm177, %v165, %v180
    %v182 = vsel %vm176, %v179, %v181
    %v183 = vsel %vm175, %v162, %v165
    %v184 = vsel %vm178, %v171, 920167782
    %v185 = vsel %vm177, %v168, %v184
    %v186 = vsel %vm176, %v183, %v185
    %v187 = vsel %vm175, %v165, %v168
    %v188 = vsel %vm178, %v174, 1326507024
    %v189 = vsel %vm177, %v171, %v188
    %v190 = vsel %vm176, %v187, %v189
    %v191 = vshll.u32 %v151, 8
    %v192 = vmul.u32.u64.compose %v191, %v190
    %v193 = vextract.low.u32 %v192
    %v194 = vextract.high.u32 %v192
    %v195 = vmul.u32.u64.compose %v191, %v186
    %v196 = vextract.low.u32 %v195
    %v197 = vextract.high.u32 %v195
    %v198 = vmul.u32 %v191, %v182
    %v199 = vadd.s32 %v194, %v196
    %vm200 = vc.u32 %v194, %v196
    %v201 = vadd.s32 %v197, 1
    %v202 = vsel %vm200, %v201, %v197
    %v203 = vadd.s32 %v198, %v202
    %v204 = vadd.s32 %v203, 536870912
    %v205 = vshrl.u32 %v204, 30
    %v206 = vshll.u32 %v205, 30
    %v207 = vsub.s32 %v203, %v206
    %vm208 = vcmp.lt.s32.totalorder %v207, 0
    %v209 = vsub.s32 0, %v207
    %v210 = vsel %vm208, %v209, %v207
    %v211 = vclz %v210
    %v212 = vsub.s32 %v211, 2
    %vm213 = vcmp.gt.s32.totalorder 0, %v212
    %v214 = vsel %vm213, 0, %v212
    %v215 = vsub.s32 32, %v214
    %v216 = vshll.u32 %v207, %v214
    %v217 = vshrl.u32 %v199, %v215
    %v218 = vor.u32 %v216, %v217
    %v219 = vsub.s32 4294967266, %v214
    %v220 = vadd.s32 %v219, 127
    %v221 = vshll.u32 %v220, 23
    %v222 = vor.u32 4788187, %v221
    %v223 = vand.u32 2147483647, %v222
    %v225 = vcvt.s32.f32 %v218
    %v226 = vmul.f32 %v225, %v223
    %v227 = vxor.u32 %v226, 2147483648
    %v228 = vsel %vm145, %v227, %v226
    %v229 = vsub.s32 4, %v205
    %v230 = vsel %vm145, %v229, %v205
    %v231 = vsel %vm144, %v38, %v228
    %v232 = vsel %vm144, 0, %v230
    %v233 = vcosq.f32.pop %v231
    %v234 = vsinq.f32.pop %v231
    %vm235 = vweird.f32 %v38
    %v236 = vadd.s32 %v232, 3
    %v237 = vand.u32 %v236, 3
    %vm238 = vcmp.lt.s32.totalorder %v237, 2
    %vm239 = vcmp.eq.s32.totalorder %v237, 0
    %v240 = vxor.u32 %v234, 2147483648
    %v241 = vsel %vm239, %v233, %v240
    %vm242 = vcmp.eq.s32.totalorder %v237, 2
    %v243 = vxor.u32 %v233, 2147483648
    %v244 = vsel %vm242, %v243, %v234
    %v245 = vsel %vm238, %v241, %v244
    %v246 = vsel %vm235, nan, %v245
    %v247 = vand.u32 2147483647, %v36
    %vm248 = vcmp.le.f32.partialorder %v247, 0.7853982
    %vm249 = vcmp.lt.s32.totalorder %v36, 0
    %v250 = vand.u32 %v36, 2139095040
    %v251 = vshrl.u32 %v250, 23
    %v252 = vsub.s32 %v251, 127
    %v253 = vand.u32 2147483647, %v36
    %v254 = vand.u32 %v253, 8388607
    %v255 = vor.u32 %v254, 8388608
    %v256 = vsub.s32 0, %v255
    %v257 = vadd.s32 %v252, 1
    %vm258 = vcmp.gt.s32.totalorder %v257, 0
    %v259 = vsel %vm258, %v257, 0
    %v260 = vshrl.u32 %v259, 5
    %v261 = vand.u32 %v259, 31
    %v262 = vsub.s32 32, %v261
    %v263 = vshrl.u32 683565275, %v262
    %v264 = vshll.u32 683565275, %v261
    %v265 = vshrl.u32 2475754826, %v262
    %v266 = vor.u32 %v264, %v265
    %v267 = vshll.u32 2475754826, %v261
    %v268 = vshrl.u32 2131351028, %v262
    %v269 = vor.u32 %v267, %v268
    %v270 = vshll.u32 2131351028, %v261
    %v271 = vshrl.u32 2102212464, %v262
    %v272 = vor.u32 %v270, %v271
    %v273 = vshll.u32 2102212464, %v261
    %v274 = vshrl.u32 920167782, %v262
    %v275 = vor.u32 %v273, %v274
    %v276 = vshll.u32 920167782, %v261
    %v277 = vshrl.u32 1326507024, %v262
    %v278 = vor.u32 %v276, %v277
    %vm279 = vcmp.lt.s32.totalorder %v260, 1
    %vm280 = vcmp.lt.s32.totalorder %v260, 2
    %vm281 = vcmp.lt.s32.totalorder %v260, 3
    %vm282 = vcmp.lt.s32.totalorder %v260, 4
    %v283 = vsel %vm279, %v263, %v266
    %v284 = vsel %vm282, %v272, 2102212464
    %v285 = vsel %vm281, %v269, %v284
    %v286 = vsel %vm280, %v283, %v285
    %v287 = vsel %vm279, %v266, %v269
    %v288 = vsel %vm282, %v275, 920167782
    %v289 = vsel %vm281, %v272, %v288
    %v290 = vsel %vm280, %v287, %v289
    %v291 = vsel %vm279, %v269, %v272
    %v292 = vsel %vm282, %v278, 1326507024
    %v293 = vsel %vm281, %v275, %v292
    %v294 = vsel %vm280, %v291, %v293
    %v295 = vshll.u32 %v255, 8
    %v296 = vmul.u32.u64.compose %v295, %v294
    %v297 = vextract.low.u32 %v296
    %v298 = vextract.high.u32 %v296
    %v299 = vmul.u32.u64.compose %v295, %v290
    %v300 = vextract.low.u32 %v299
    %v301 = vextract.high.u32 %v299
    %v302 = vmul.u32 %v295, %v286
    %v303 = vadd.s32 %v298, %v300
    %vm304 = vc.u32 %v298, %v300
    %v305 = vadd.s32 %v301, 1
    %v306 = vsel %vm304, %v305, %v301
    %v307 = vadd.s32 %v302, %v306
    %v308 = vadd.s32 %v307, 536870912
    %v309 = vshrl.u32 %v308, 30
    %v310 = vshll.u32 %v309, 30
    %v311 = vsub.s32 %v307, %v310
    %vm312 = vcmp.lt.s32.totalorder %v311, 0
    %v313 = vsub.s32 0, %v311
    %v314 = vsel %vm312, %v313, %v311
    %v315 = vclz %v314
    %v316 = vsub.s32 %v315, 2
    %vm317 = vcmp.gt.s32.totalorder 0, %v316
    %v318 = vsel %vm317, 0, %v316
    %v319 = vsub.s32 32, %v318
    %v320 = vshll.u32 %v311, %v318
    %v321 = vshrl.u32 %v303, %v319
    %v322 = vor.u32 %v320, %v321
    %v323 = vsub.s32 4294967266, %v318
    %v324 = vadd.s32 %v323, 127
    %v325 = vshll.u32 %v324, 23
    %v326 = vor.u32 4788187, %v325
    %v327 = vand.u32 2147483647, %v326
    %v329 = vcvt.s32.f32 %v322
    %v330 = vmul.f32 %v329, %v327
    %v331 = vxor.u32 %v330, 2147483648
    %v332 = vsel %vm249, %v331, %v330
    %v333 = vsub.s32 4, %v309
    %v334 = vsel %vm249, %v333, %v309
    %v335 = vsel %vm248, %v36, %v332
    %v336 = vsel %vm248, 0, %v334
    %v337 = vcosq.f32.pop %v335
    %v338 = vsinq.f32.pop %v335
    %vm339 = vweird.f32 %v36
    %v340 = vand.u32 %v336, 3
    %vm341 = vcmp.lt.s32.totalorder %v340, 2
    %vm342 = vcmp.eq.s32.totalorder %v340, 0
    %v343 = vxor.u32 %v338, 2147483648
    %v344 = vsel %vm342, %v337, %v343
    %vm345 = vcmp.eq.s32.totalorder %v340, 2
    %v346 = vxor.u32 %v337, 2147483648
    %v347 = vsel %vm345, %v346, %v338
    %v348 = vsel %vm341, %v344, %v347
    %v349 = vsel %vm339, nan, %v348
    %v350 = vand.u32 2147483647, %v38
    %vm351 = vcmp.le.f32.partialorder %v350, 0.7853982
    %vm352 = vcmp.lt.s32.totalorder %v38, 0
    %v353 = vand.u32 %v38, 2139095040
    %v354 = vshrl.u32 %v353, 23
    %v355 = vsub.s32 %v354, 127
    %v356 = vand.u32 2147483647, %v38
    %v357 = vand.u32 %v356, 8388607
    %v358 = vor.u32 %v357, 8388608
    %v359 = vsub.s32 0, %v358
    %v360 = vadd.s32 %v355, 1
    %vm361 = vcmp.gt.s32.totalorder %v360, 0
    %v362 = vsel %vm361, %v360, 0
    %v363 = vshrl.u32 %v362, 5
    %v364 = vand.u32 %v362, 31
    %v365 = vsub.s32 32, %v364
    %v366 = vshrl.u32 683565275, %v365
    %v367 = vshll.u32 683565275, %v364
    %v368 = vshrl.u32 2475754826, %v365
    %v369 = vor.u32 %v367, %v368
    %v370 = vshll.u32 2475754826, %v364
    %v371 = vshrl.u32 2131351028, %v365
    %v372 = vor.u32 %v370, %v371
    %v373 = vshll.u32 2131351028, %v364
    %v374 = vshrl.u32 2102212464, %v365
    %v375 = vor.u32 %v373, %v374
    %v376 = vshll.u32 2102212464, %v364
    %v377 = vshrl.u32 920167782, %v365
    %v378 = vor.u32 %v376, %v377
    %v379 = vshll.u32 920167782, %v364
    %v380 = vshrl.u32 1326507024, %v365
    %v381 = vor.u32 %v379, %v380
    %vm382 = vcmp.lt.s32.totalorder %v363, 1
    %vm383 = vcmp.lt.s32.totalorder %v363, 2
    %vm384 = vcmp.lt.s32.totalorder %v363, 3
    %vm385 = vcmp.lt.s32.totalorder %v363, 4
    %v386 = vsel %vm382, %v366, %v369
    %v387 = vsel %vm385, %v375, 2102212464
    %v388 = vsel %vm384, %v372, %v387
    %v389 = vsel %vm383, %v386, %v388
    %v390 = vsel %vm382, %v369, %v372
    %v391 = vsel %vm385, %v378, 920167782
    %v392 = vsel %vm384, %v375, %v391
    %v393 = vsel %vm383, %v390, %v392
    %v394 = vsel %vm382, %v372, %v375
    %v395 = vsel %vm385, %v381, 1326507024
    %v396 = vsel %vm384, %v378, %v395
    %v397 = vsel %vm383, %v394, %v396
    %v398 = vshll.u32 %v358, 8
    %v399 = vmul.u32.u64.compose %v398, %v397
    %v400 = vextract.low.u32 %v399
    %v401 = vextract.high.u32 %v399
    %v402 = vmul.u32.u64.compose %v398, %v393
    %v403 = vextract.low.u32 %v402
    %v404 = vextract.high.u32 %v402
    %v405 = vmul.u32 %v398, %v389
    %v406 = vadd.s32 %v401, %v403
    %vm407 = vc.u32 %v401, %v403
    %v408 = vadd.s32 %v404, 1
    %v409 = vsel %vm407, %v408, %v404
    %v410 = vadd.s32 %v405, %v409
    %v411 = vadd.s32 %v410, 536870912
    %v412 = vshrl.u32 %v411, 30
    %v413 = vshll.u32 %v412, 30
    %v414 = vsub.s32 %v410, %v413
    %vm415 = vcmp.lt.s32.totalorder %v414, 0
    %v416 = vsub.s32 0, %v414
    %v417 = vsel %vm415, %v416, %v414
    %v418 = vclz %v417
    %v419 = vsub.s32 %v418, 2
    %vm420 = vcmp.gt.s32.totalorder 0, %v419
    %v421 = vsel %vm420, 0, %v419
    %v422 = vsub.s32 32, %v421
    %v423 = vshll.u32 %v414, %v421
    %v424 = vshrl.u32 %v406, %v422
    %v425 = vor.u32 %v423, %v424
    %v426 = vsub.s32 4294967266, %v421
    %v427 = vadd.s32 %v426, 127
    %v428 = vshll.u32 %v427, 23
    %v429 = vor.u32 4788187, %v428
    %v430 = vand.u32 2147483647, %v429
    %v432 = vcvt.s32.f32 %v425
    %v433 = vmul.f32 %v432, %v430
    %v434 = vxor.u32 %v433, 2147483648
    %v435 = vsel %vm352, %v434, %v433
    %v436 = vsub.s32 4, %v412
    %v437 = vsel %vm352, %v436, %v412
    %v438 = vsel %vm351, %v38, %v435
    %v439 = vsel %vm351, 0, %v437
    %v440 = vcosq.f32.pop %v438
    %v441 = vsinq.f32.pop %v438
    %vm442 = vweird.f32 %v38
    %v443 = vand.u32 %v439, 3
    %vm444 = vcmp.lt.s32.totalorder %v443, 2
    %vm445 = vcmp.eq.s32.totalorder %v443, 0
    %v446 = vxor.u32 %v441, 2147483648
    %v447 = vsel %vm445, %v440, %v446
    %vm448 = vcmp.eq.s32.totalorder %v443, 2
    %v449 = vxor.u32 %v440, 2147483648
    %v450 = vsel %vm448, %v449, %v441
    %v451 = vsel %vm444, %v447, %v450
    %v452 = vsel %vm442, nan, %v451
    %v454 = vrot.slane %v142, 5
    %v457 = vrot.slane %v349, 2
    %v459 = vrot.slane %v142, 2
    %v461 = vrot.slane %v349, 7
    %v464 = vrot.slane %v142, 7
    %v465 = vrot.slane %v246, 7
    %v466 = vsel %vm37, %v464, %v465
    %vm470 = vcmask 1043456
    %v471 = vrot.slane %v349, 4
    %v472 = vrot.slane %v452, 4
    %v473 = vsel %vm470, %v471, %v472
    %v475 = vrot.slane %v246, 4
    %v477 = vrot.slane %v452, 1
    %v479 = vsel %vm33, %v20, %v454
    %v480 = vsel %vm35, %v479, %v457
    %v481 = vsel %vm37, %v457, %v459
    %v482 = vsel %vm470, %v481, %v461
    %vm483 = vcmask 1046528
    %v484 = vsel %vm483, %v482, %v464
    %vm485 = vcmask 1041408
    %v486 = vsel %vm485, %v466, %v473
    %vm487 = vcmask 1044480
    %v488 = vsel %vm487, %v486, %v475
    %v489 = vsel %vm33, %v477, 0.0
    %490 = vxpose.xlu0.b32.start [1/16] %v480, 128
    %491 = vxpose.xlu0.b32.cont [2/16] %v484, 128
    %492 = vxpose.xlu0.b32.cont [3/16] %v488, 128
    %493 = vxpose.xlu0.b32.cont [4/16] %v489, 128
    %494 = vxpose.xlu0.b32.cont [5/16] 0.0, 128
    %495 = vxpose.xlu0.b32.cont [6/16] 0.0, 128
    %496 = vxpose.xlu0.b32.cont [7/16] 0.0, 128
    %497 = vxpose.xlu0.b32.cont [8/16] 0.0, 128
    %498 = vxpose.xlu0.b32.cont [9/16] 0.0, 128
    %499 = vxpose.xlu0.b32.cont [10/16] 0.0, 128
    %500 = vxpose.xlu0.b32.cont [11/16] 0.0, 128
    %501 = vxpose.xlu0.b32.cont [12/16] 0.0, 128
    %502 = vxpose.xlu0.b32.cont [13/16] 0.0, 128
    %503 = vxpose.xlu0.b32.cont [14/16] 0.0, 128
    %504 = vxpose.xlu0.b32.cont [15/16] 0.0, 128
    %505 = vxpose.xlu0.b32.end [16/16] 0.0, 128
    %v506 = vpop.trf.xlu0
    %v507 = vpop.trf.xlu0
    %v508 = vpop.trf.xlu0
    %v509 = vpop.trf.xlu0
    %v510 = vpop.trf.xlu0
    %v511 = vpop.trf.xlu0
    %v512 = vpop.trf.xlu0
    %v513 = vpop.trf.xlu0
    %v514 = vpop.trf.xlu0
    %v515 = vpop.trf.xlu0
    %v516 = vpop.trf.xlu0
    %v517 = vpop.trf.xlu0
    %v518 = vpop.trf.xlu0
    %v519 = vpop.trf.xlu0
    %v520 = vpop.trf.xlu0
    %v521 = vpop.trf.xlu0
    %vm522 = vcmask 220160
    %523 = vst.msk [vmem:[%s1] sm:$0xff] %vm522, %v506
    %524 = vst.msk [vmem:[%s1 + $0x8] sm:$0xff] %vm522, %v507
    %525 = vst.msk [vmem:[%s1 + $0x10] sm:$0xff] %vm522, %v508
    %526 = vst.msk [vmem:[%s1 + $0x18] sm:$0xff] %vm522, %v509
    %527 = vst.msk [vmem:[%s1 + $0x20] sm:$0xff] %vm522, %v510
    %528 = vst.msk [vmem:[%s1 + $0x28] sm:$0xff] %vm522, %v511
    %529 = vst.msk [vmem:[%s1 + $0x30] sm:$0xff] %vm522, %v512
    %530 = vst.msk [vmem:[%s1 + $0x38] sm:$0xff] %vm522, %v513
    %531 = vst.msk [vmem:[%s1 + $0x40] sm:$0xff] %vm522, %v514
    %532 = vst.msk [vmem:[%s1 + $0x48] sm:$0xff] %vm522, %v515
    %533 = vst.msk [vmem:[%s1 + $0x50] sm:$0xff] %vm522, %v516
    %534 = vst.msk [vmem:[%s1 + $0x58] sm:$0xff] %vm522, %v517
    %535 = vst.msk [vmem:[%s1 + $0x60] sm:$0xff] %vm522, %v518
    %536 = vst.msk [vmem:[%s1 + $0x68] sm:$0xff] %vm522, %v519
    %537 = vst.msk [vmem:[%s1 + $0x70] sm:$0xff] %vm522, %v520
    %538 = vst.msk [vmem:[%s1 + $0x78] sm:$0xff] %vm522, %v521
    // Predicated region
    $region10: #{tpu_custom_call.1} parent=1 // pred_check
      _
    $region11: #{tpu_custom_call.1} parent=1 // pred_check_branch
      %540 = sbr.rel (0) target = $region13
    $region12: #{tpu_custom_call.1} parent=1 // pred_region
      _
    $region13: #{tpu_custom_call.1} parent=1 // pred_fallthru
      _
    // Predicated region
    $region14: #{tpu_custom_call.1} parent=1 // pred_check
      _
    $region15: #{tpu_custom_call.1} parent=1 // pred_check_branch
      %542 = sbr.rel (0) target = $region17
    $region16: #{tpu_custom_call.1} parent=1 // pred_region
      _
    $region17: #{tpu_custom_call.1} parent=1 // pred_fallthru
      _
    %543 = vsyncpa [#allocation3], 1

</llo_original>
